<compile_context>
chip_gen: v5e
topology: v5e:2x2
jax: 0.10.0
libtpu: 0.0.40
codegen_flags: <defaults>
</compile_context>

<pallas_src>
import functools

import jax
import jax.numpy as jnp
from jax import lax
from jax.experimental import pallas as pl
from jax.experimental.pallas import tpu as pltpu

BINS = 10
ALPHA = 0.75


def _edges(bins):
    e = [float(i) / bins for i in range(bins + 1)]
    e[-1] += 1e-6
    return e


def _ghm_partial_kernel(x_ref, t_ref, out_ref, *, bins):
    """Per-tile partial reduction.

    x_ref, t_ref : (TILE_N, C) f32 blocks
    out_ref      : (8, 128) f32 slab;
                   row 0 lanes [0:bins+1] = S_i = count of {g >= edges[i]},
                   row 1 lanes [0:bins+1] = T_i = sum(bce | g >= edges[i]).
    """
    x = x_ref[...]                                  # (TILE_N, C)
    t = t_ref[...]

    # One shared transcendental: z = exp(-|x|)   (no overflow for very
    # negative x; reused for both sigmoid and the stable BCE).
    z = jnp.exp(-jnp.abs(x))
    inv = 1.0 / (1.0 + z)                           # sigmoid(|x|)
    p = jnp.where(x >= 0.0, inv, 1.0 - inv)         # sigmoid(x)
    g = jnp.abs(p - t)                              # gradient norm of BCE

    # Stable BCE-with-logits, reusing z.
    bce = jnp.maximum(x, 0.0) - x * t + jnp.log(1.0 + z)

    def _reduce(v):                                 # full-tile sum -> (1, 1)
        return jnp.sum(jnp.sum(v, axis=1, keepdims=True),
                       axis=0, keepdims=True)

    lane = lax.broadcasted_iota(jnp.int32, (8, 128), 1)
    sub = lax.broadcasted_iota(jnp.int32, (8, 128), 0)
    out = jnp.zeros((8, 128), jnp.float32)

    edges = _edges(bins)

    # Edge 0 is 0.0 and g = |.| >= 0 always: S_0 is the tile size (constant),
    # T_0 is the plain bce sum -- no compare needed.
    total = float(x.shape[0] * x.shape[1])
    t0 = _reduce(bce)
    out = jnp.where((sub == 0) & (lane == 0), total, out)
    out = jnp.where((sub == 1) & (lane == 0), t0, out)

    # Remaining edges: single ">=" compare per edge per element.
    for i in range(1, bins + 1):                    # bins is small & static
        ge = (g >= edges[i]).astype(jnp.float32)
        s_i = _reduce(ge)                           # (1, 1)
        t_i = _reduce(ge * bce)                     # (1, 1)
        out = jnp.where((sub == 0) & (lane == i), s_i, out)
        out = jnp.where((sub == 1) & (lane == i), t_i, out)

    out_ref[...] = out


def _pick_tile_n(n, max_tile=1024):
    t = (min(max_tile, n) // 8) * 8
    while t >= 8:
        if n % t == 0:
            return t
        t -= 8
    return n


def ghm_loss(x, target, acc_sum, *, bins=BINS, alpha=ALPHA, tile_n=None):
    """x, target: (N, C) f32.  acc_sum: (bins,) f32 EMA state.
    Returns (scalar loss, updated acc_sum)."""
    x = x.astype(jnp.float32)
    target = target.astype(jnp.float32)
    acc_sum = acc_sum.astype(jnp.float32)
    N, C = x.shape

    if tile_n is None:
        tile_n = _pick_tile_n(N)
    if N % tile_n != 0 or tile_n % 8 != 0:
        tile_n = N                                  # single-tile fallback
    num_tiles = N // tile_n

    kernel = functools.partial(_ghm_partial_kernel, bins=bins)
    partials = pl.pallas_call(
        kernel,
        out_shape=jax.ShapeDtypeStruct((num_tiles, 8, 128), jnp.float32),
        grid_spec=pltpu.PrefetchScalarGridSpec(
            num_scalar_prefetch=0,
            grid=(num_tiles,),
            in_specs=[pl.BlockSpec((tile_n, C), lambda i: (i, 0)),
                      pl.BlockSpec((tile_n, C), lambda i: (i, 0))],
            out_specs=pl.BlockSpec((None, 8, 128), lambda i: (i, 0, 0)),
        ),
        compiler_params=pltpu.CompilerParams(
            dimension_semantics=("parallel",),       # shards tiles across TCs
            vmem_limit_bytes=32 * 1024 * 1024,       # safe on v5e/v6e/v7x
        ),
    )(x, target)

    # ---- tiny epilogue on (bins,)-sized vectors (plain JAX) ----
    S = jnp.sum(partials[:, 0, :bins + 1], axis=0)        # (bins+1,)
    T = jnp.sum(partials[:, 1, :bins + 1], axis=0)        # (bins+1,)
    counts = S[:bins] - S[1:]                             # per-bin counts
    bce_sums = T[:bins] - T[1:]                           # per-bin bce sums
    unbinned_bce = T[bins]                                 # g >= edges[-1]
    n = float(N * C)

    has = counts >= 1.0
    if alpha > 0:
        acc_new = jnp.where(has, alpha * acc_sum + (1.0 - alpha) * counts,
                            acc_sum)
        denom = acc_new
    else:
        acc_new = acc_sum
        denom = counts
    nonempty = jnp.sum(has.astype(jnp.float32))

    w = jnp.where(has, n / jnp.maximum(denom, 1e-12), 0.0)
    w = jnp.where(nonempty > 0.0, w / jnp.maximum(nonempty, 1.0), w)
    w = jnp.maximum(w, 1e-4)                               # clamp(min=1e-4)

    # Elements whose g falls outside every bin keep weight 0 -> clamp 1e-4.
    loss = (jnp.sum(w * bce_sums) + 1e-4 * unbinned_bce) / n
    return loss, acc_new


def ghm_loss_ref(x, target, acc_sum, bins=BINS, alpha=ALPHA):
    """Pure-JAX reference mirroring the PyTorch forward semantics."""
    edges = _edges(bins)
    p = 1.0 / (1.0 + jnp.exp(-x))
    g = jnp.abs(p - target)
    n = x.shape[0] * x.shape[1]
    weights = jnp.zeros_like(x)
    nonempty = jnp.float32(0.0)
    new_acc = []
    for i in range(bins):
        indx = (g >= edges[i]) & (g < edges[i + 1])
        cnt = jnp.sum(indx.astype(jnp.float32))
        has = cnt >= 1.0
        if alpha > 0:
            acc_upd = alpha * acc_sum[i] + (1.0 - alpha) * cnt
            acc_i = jnp.where(has, acc_upd, acc_sum[i])
            new_acc.append(acc_i)
            denom = acc_i
        else:
            new_acc.append(acc_sum[i])
            denom = cnt
        weights = jnp.where(indx & has, n / jnp.maximum(denom, 1e-12), weights)
        nonempty = nonempty + jnp.where(has, 1.0, 0.0)
    weights = jnp.where(nonempty > 0.0,
                        weights / jnp.maximum(nonempty, 1.0), weights)
    weights = jnp.maximum(weights, 1e-4)
    bce = jnp.maximum(x, 0.0) - x * target + jnp.log(1.0 + jnp.exp(-jnp.abs(x)))
    return jnp.mean(weights * bce), jnp.stack(new_acc)


if __name__ == "__main__":
    key = jax.random.PRNGKey(0)
    kx, kt = jax.random.split(key)
    N, C = 64, 128
    x = jax.random.normal(kx, (N, C), dtype=jnp.float32)
    target = (jax.random.uniform(kt, (N, C)) > 0.5).astype(jnp.float32)
    # Deterministic module state: GHMLoss.__init__ sets acc_sum = [0.0]*bins.
    acc_sum = jnp.zeros((BINS,), jnp.float32)

    ref_loss, ref_acc = ghm_loss_ref(x, target, acc_sum)

    # Multi-tile path: tile_n=16 -> 4 grid steps, exercising the pipelined /
    # "parallel" grid.
    loss, new_acc = ghm_loss(x, target, acc_sum, tile_n=16)
    loss = jax.block_until_ready(loss)
    new_acc = jax.block_until_ready(new_acc)
    assert jnp.allclose(loss, ref_loss, rtol=1e-3, atol=1e-5), (loss, ref_loss)
    assert jnp.allclose(new_acc, ref_acc, rtol=1e-3, atol=1e-5), (new_acc, ref_acc)

    # Default (auto-tile, single grid step) path.
    loss2, new_acc2 = ghm_loss(x, target, acc_sum)
    loss2 = jax.block_until_ready(loss2)
    new_acc2 = jax.block_until_ready(new_acc2)
    assert jnp.allclose(loss2, ref_loss, rtol=1e-3, atol=1e-5), (loss2, ref_loss)
    assert jnp.allclose(new_acc2, ref_acc, rtol=1e-3, atol=1e-5), (new_acc2, ref_acc)

    print("KERNEL_OK")
</pallas_src>

<mosaic_0001>
module attributes {stable_mosaic.version = 11 : i64} {
  func.func @_ghm_partial_kernel(%arg0: i32, %arg1: memref<16x128xf32, #tpu.memory_space<vmem>>, %arg2: memref<16x128xf32, #tpu.memory_space<vmem>>, %arg3: memref<1x8x128xf32, #tpu.memory_space<vmem>>) attributes {dimension_semantics = [#tpu.dimension_semantics<parallel>], iteration_bounds = array<i64: 4>, scalar_prefetch = 0 : i64, scratch_operands = 0 : i64, tpu.core_type = #tpu.core_type<tc>, window_params = [{transform_indices = @transform_0, window_bounds = array<i64: 16, 128>}, {transform_indices = @transform_1, window_bounds = array<i64: 16, 128>}, {transform_indices = @transform_2, window_bounds = array<i64: 1, 8, 128>}]} {
    %c0 = arith.constant 0 : index
    %c0_0 = arith.constant 0 : index
    %0 = vector.load %arg1[%c0, %c0_0] : memref<16x128xf32, #tpu.memory_space<vmem>>, vector<16x128xf32>
    %c0_1 = arith.constant 0 : index
    %c0_2 = arith.constant 0 : index
    %1 = vector.load %arg2[%c0_1, %c0_2] : memref<16x128xf32, #tpu.memory_space<vmem>>, vector<16x128xf32>
    %2 = math.absf %0 : vector<16x128xf32>
    %cst = arith.constant 0.000000e+00 : f32
    %3 = vector.broadcast %cst : f32 to vector<16x128xf32>
    %4 = arith.subf %3, %2 : vector<16x128xf32>
    %5 = math.exp %4 : vector<16x128xf32>
    %cst_3 = arith.constant 1.000000e+00 : f32
    %6 = vector.broadcast %cst_3 : f32 to vector<16x128xf32>
    %7 = arith.addf %6, %5 : vector<16x128xf32>
    %cst_4 = arith.constant 1.000000e+00 : f32
    %8 = vector.broadcast %cst_4 : f32 to vector<16x128xf32>
    %9 = arith.divf %8, %7 : vector<16x128xf32>
    %cst_5 = arith.constant 0.000000e+00 : f32
    %10 = vector.broadcast %cst_5 : f32 to vector<16x128xf32>
    %11 = arith.cmpf oge, %0, %10 : vector<16x128xf32>
    %cst_6 = arith.constant 1.000000e+00 : f32
    %12 = vector.broadcast %cst_6 : f32 to vector<16x128xf32>
    %13 = arith.subf %12, %9 : vector<16x128xf32>
    %14 = arith.select %11, %9, %13 : vector<16x128xi1>, vector<16x128xf32>
    %15 = arith.subf %14, %1 : vector<16x128xf32>
    %16 = math.absf %15 : vector<16x128xf32>
    %cst_7 = arith.constant 0.000000e+00 : f32
    %17 = vector.broadcast %cst_7 : f32 to vector<16x128xf32>
    %18 = arith.maximumf %0, %17 : vector<16x128xf32>
    %19 = arith.mulf %0, %1 : vector<16x128xf32>
    %20 = arith.subf %18, %19 : vector<16x128xf32>
    %cst_8 = arith.constant 1.000000e+00 : f32
    %21 = vector.broadcast %cst_8 : f32 to vector<16x128xf32>
    %22 = arith.addf %21, %5 : vector<16x128xf32>
    %23 = math.log %22 : vector<16x128xf32>
    %24 = arith.addf %20, %23 : vector<16x128xf32>
    %25 = tpu.iota {dimensions = array<i32: 1>} : vector<8x128xi32>
    %26 = tpu.iota {dimensions = array<i32: 0>} : vector<8x128xi32>
    %cst_9 = arith.constant 0.000000e+00 : f32
    %27 = vector.broadcast %cst_9 : f32 to vector<8x128xf32>
    %cst_10 = arith.constant dense<0.000000e+00> : vector<16xf32>
    %28 = vector.multi_reduction <add>, %24, %cst_10 [1] : vector<16x128xf32> to vector<16xf32>
    %29 = vector.shape_cast %28 : vector<16xf32> to vector<16x1xf32>
    %cst_11 = arith.constant dense<0.000000e+00> : vector<1xf32>
    %30 = vector.multi_reduction <add>, %29, %cst_11 [0] : vector<16x1xf32> to vector<1xf32>
    %31 = vector.shape_cast %30 : vector<1xf32> to vector<1x1xf32>
    %c0_i32 = arith.constant 0 : i32
    %32 = vector.broadcast %c0_i32 : i32 to vector<8x128xi32>
    %33 = arith.cmpi eq, %26, %32 : vector<8x128xi32>
    %c0_i32_12 = arith.constant 0 : i32
    %34 = vector.broadcast %c0_i32_12 : i32 to vector<8x128xi32>
    %35 = arith.cmpi eq, %25, %34 : vector<8x128xi32>
    %36 = arith.andi %33, %35 : vector<8x128xi1>
    %cst_13 = arith.constant 2.048000e+03 : f32
    %37 = vector.broadcast %cst_13 : f32 to vector<8x128xf32>
    %38 = arith.select %36, %37, %27 : vector<8x128xi1>, vector<8x128xf32>
    %c1_i32 = arith.constant 1 : i32
    %39 = vector.broadcast %c1_i32 : i32 to vector<8x128xi32>
    %40 = arith.cmpi eq, %26, %39 : vector<8x128xi32>
    %c0_i32_14 = arith.constant 0 : i32
    %41 = vector.broadcast %c0_i32_14 : i32 to vector<8x128xi32>
    %42 = arith.cmpi eq, %25, %41 : vector<8x128xi32>
    %43 = arith.andi %40, %42 : vector<8x128xi1>
    %44 = vector.shape_cast %31 : vector<1x1xf32> to vector<1x1xf32>
    %45 = vector.broadcast %44 : vector<1x1xf32> to vector<8x128xf32>
    %46 = arith.select %43, %45, %38 : vector<8x128xi1>, vector<8x128xf32>
    %cst_15 = arith.constant 1.000000e-01 : f32
    %47 = vector.broadcast %cst_15 : f32 to vector<16x128xf32>
    %48 = arith.cmpf oge, %16, %47 : vector<16x128xf32>
    %49 = arith.extui %48 : vector<16x128xi1> to vector<16x128xi32>
    %50 = arith.sitofp %49 : vector<16x128xi32> to vector<16x128xf32>
    %cst_16 = arith.constant dense<0.000000e+00> : vector<16xf32>
    %51 = vector.multi_reduction <add>, %50, %cst_16 [1] : vector<16x128xf32> to vector<16xf32>
    %52 = vector.shape_cast %51 : vector<16xf32> to vector<16x1xf32>
    %cst_17 = arith.constant dense<0.000000e+00> : vector<1xf32>
    %53 = vector.multi_reduction <add>, %52, %cst_17 [0] : vector<16x1xf32> to vector<1xf32>
    %54 = vector.shape_cast %53 : vector<1xf32> to vector<1x1xf32>
    %55 = arith.mulf %50, %24 : vector<16x128xf32>
    %cst_18 = arith.constant dense<0.000000e+00> : vector<16xf32>
    %56 = vector.multi_reduction <add>, %55, %cst_18 [1] : vector<16x128xf32> to vector<16xf32>
    %57 = vector.shape_cast %56 : vector<16xf32> to vector<16x1xf32>
    %cst_19 = arith.constant dense<0.000000e+00> : vector<1xf32>
    %58 = vector.multi_reduction <add>, %57, %cst_19 [0] : vector<16x1xf32> to vector<1xf32>
    %59 = vector.shape_cast %58 : vector<1xf32> to vector<1x1xf32>
    %c0_i32_20 = arith.constant 0 : i32
    %60 = vector.broadcast %c0_i32_20 : i32 to vector<8x128xi32>
    %61 = arith.cmpi eq, %26, %60 : vector<8x128xi32>
    %c1_i32_21 = arith.constant 1 : i32
    %62 = vector.broadcast %c1_i32_21 : i32 to vector<8x128xi32>
    %63 = arith.cmpi eq, %25, %62 : vector<8x128xi32>
    %64 = arith.andi %61, %63 : vector<8x128xi1>
    %65 = vector.shape_cast %54 : vector<1x1xf32> to vector<1x1xf32>
    %66 = vector.broadcast %65 : vector<1x1xf32> to vector<8x128xf32>
    %67 = arith.select %64, %66, %46 : vector<8x128xi1>, vector<8x128xf32>
    %c1_i32_22 = arith.constant 1 : i32
    %68 = vector.broadcast %c1_i32_22 : i32 to vector<8x128xi32>
    %69 = arith.cmpi eq, %26, %68 : vector<8x128xi32>
    %c1_i32_23 = arith.constant 1 : i32
    %70 = vector.broadcast %c1_i32_23 : i32 to vector<8x128xi32>
    %71 = arith.cmpi eq, %25, %70 : vector<8x128xi32>
    %72 = arith.andi %69, %71 : vector<8x128xi1>
    %73 = vector.shape_cast %59 : vector<1x1xf32> to vector<1x1xf32>
    %74 = vector.broadcast %73 : vector<1x1xf32> to vector<8x128xf32>
    %75 = arith.select %72, %74, %67 : vector<8x128xi1>, vector<8x128xf32>
    %cst_24 = arith.constant 2.000000e-01 : f32
    %76 = vector.broadcast %cst_24 : f32 to vector<16x128xf32>
    %77 = arith.cmpf oge, %16, %76 : vector<16x128xf32>
    %78 = arith.extui %77 : vector<16x128xi1> to vector<16x128xi32>
    %79 = arith.sitofp %78 : vector<16x128xi32> to vector<16x128xf32>
    %cst_25 = arith.constant dense<0.000000e+00> : vector<16xf32>
    %80 = vector.multi_reduction <add>, %79, %cst_25 [1] : vector<16x128xf32> to vector<16xf32>
    %81 = vector.shape_cast %80 : vector<16xf32> to vector<16x1xf32>
    %cst_26 = arith.constant dense<0.000000e+00> : vector<1xf32>
    %82 = vector.multi_reduction <add>, %81, %cst_26 [0] : vector<16x1xf32> to vector<1xf32>
    %83 = vector.shape_cast %82 : vector<1xf32> to vector<1x1xf32>
    %84 = arith.mulf %79, %24 : vector<16x128xf32>
    %cst_27 = arith.constant dense<0.000000e+00> : vector<16xf32>
    %85 = vector.multi_reduction <add>, %84, %cst_27 [1] : vector<16x128xf32> to vector<16xf32>
    %86 = vector.shape_cast %85 : vector<16xf32> to vector<16x1xf32>
    %cst_28 = arith.constant dense<0.000000e+00> : vector<1xf32>
    %87 = vector.multi_reduction <add>, %86, %cst_28 [0] : vector<16x1xf32> to vector<1xf32>
    %88 = vector.shape_cast %87 : vector<1xf32> to vector<1x1xf32>
    %c0_i32_29 = arith.constant 0 : i32
    %89 = vector.broadcast %c0_i32_29 : i32 to vector<8x128xi32>
    %90 = arith.cmpi eq, %26, %89 : vector<8x128xi32>
    %c2_i32 = arith.constant 2 : i32
    %91 = vector.broadcast %c2_i32 : i32 to vector<8x128xi32>
    %92 = arith.cmpi eq, %25, %91 : vector<8x128xi32>
    %93 = arith.andi %90, %92 : vector<8x128xi1>
    %94 = vector.shape_cast %83 : vector<1x1xf32> to vector<1x1xf32>
    %95 = vector.broadcast %94 : vector<1x1xf32> to vector<8x128xf32>
    %96 = arith.select %93, %95, %75 : vector<8x128xi1>, vector<8x128xf32>
    %c1_i32_30 = arith.constant 1 : i32
    %97 = vector.broadcast %c1_i32_30 : i32 to vector<8x128xi32>
    %98 = arith.cmpi eq, %26, %97 : vector<8x128xi32>
    %c2_i32_31 = arith.constant 2 : i32
    %99 = vector.broadcast %c2_i32_31 : i32 to vector<8x128xi32>
    %100 = arith.cmpi eq, %25, %99 : vector<8x128xi32>
    %101 = arith.andi %98, %100 : vector<8x128xi1>
    %102 = vector.shape_cast %88 : vector<1x1xf32> to vector<1x1xf32>
    %103 = vector.broadcast %102 : vector<1x1xf32> to vector<8x128xf32>
    %104 = arith.select %101, %103, %96 : vector<8x128xi1>, vector<8x128xf32>
    %cst_32 = arith.constant 3.000000e-01 : f32
    %105 = vector.broadcast %cst_32 : f32 to vector<16x128xf32>
    %106 = arith.cmpf oge, %16, %105 : vector<16x128xf32>
    %107 = arith.extui %106 : vector<16x128xi1> to vector<16x128xi32>
    %108 = arith.sitofp %107 : vector<16x128xi32> to vector<16x128xf32>
    %cst_33 = arith.constant dense<0.000000e+00> : vector<16xf32>
    %109 = vector.multi_reduction <add>, %108, %cst_33 [1] : vector<16x128xf32> to vector<16xf32>
    %110 = vector.shape_cast %109 : vector<16xf32> to vector<16x1xf32>
    %cst_34 = arith.constant dense<0.000000e+00> : vector<1xf32>
    %111 = vector.multi_reduction <add>, %110, %cst_34 [0] : vector<16x1xf32> to vector<1xf32>
    %112 = vector.shape_cast %111 : vector<1xf32> to vector<1x1xf32>
    %113 = arith.mulf %108, %24 : vector<16x128xf32>
    %cst_35 = arith.constant dense<0.000000e+00> : vector<16xf32>
    %114 = vector.multi_reduction <add>, %113, %cst_35 [1] : vector<16x128xf32> to vector<16xf32>
    %115 = vector.shape_cast %114 : vector<16xf32> to vector<16x1xf32>
    %cst_36 = arith.constant dense<0.000000e+00> : vector<1xf32>
    %116 = vector.multi_reduction <add>, %115, %cst_36 [0] : vector<16x1xf32> to vector<1xf32>
    %117 = vector.shape_cast %116 : vector<1xf32> to vector<1x1xf32>
    %c0_i32_37 = arith.constant 0 : i32
    %118 = vector.broadcast %c0_i32_37 : i32 to vector<8x128xi32>
    %119 = arith.cmpi eq, %26, %118 : vector<8x128xi32>
    %c3_i32 = arith.constant 3 : i32
    %120 = vector.broadcast %c3_i32 : i32 to vector<8x128xi32>
    %121 = arith.cmpi eq, %25, %120 : vector<8x128xi32>
    %122 = arith.andi %119, %121 : vector<8x128xi1>
    %123 = vector.shape_cast %112 : vector<1x1xf32> to vector<1x1xf32>
    %124 = vector.broadcast %123 : vector<1x1xf32> to vector<8x128xf32>
    %125 = arith.select %122, %124, %104 : vector<8x128xi1>, vector<8x128xf32>
    %c1_i32_38 = arith.constant 1 : i32
    %126 = vector.broadcast %c1_i32_38 : i32 to vector<8x128xi32>
    %127 = arith.cmpi eq, %26, %126 : vector<8x128xi32>
    %c3_i32_39 = arith.constant 3 : i32
    %128 = vector.broadcast %c3_i32_39 : i32 to vector<8x128xi32>
    %129 = arith.cmpi eq, %25, %128 : vector<8x128xi32>
    %130 = arith.andi %127, %129 : vector<8x128xi1>
    %131 = vector.shape_cast %117 : vector<1x1xf32> to vector<1x1xf32>
    %132 = vector.broadcast %131 : vector<1x1xf32> to vector<8x128xf32>
    %133 = arith.select %130, %132, %125 : vector<8x128xi1>, vector<8x128xf32>
    %cst_40 = arith.constant 4.000000e-01 : f32
    %134 = vector.broadcast %cst_40 : f32 to vector<16x128xf32>
    %135 = arith.cmpf oge, %16, %134 : vector<16x128xf32>
    %136 = arith.extui %135 : vector<16x128xi1> to vector<16x128xi32>
    %137 = arith.sitofp %136 : vector<16x128xi32> to vector<16x128xf32>
    %cst_41 = arith.constant dense<0.000000e+00> : vector<16xf32>
    %138 = vector.multi_reduction <add>, %137, %cst_41 [1] : vector<16x128xf32> to vector<16xf32>
    %139 = vector.shape_cast %138 : vector<16xf32> to vector<16x1xf32>
    %cst_42 = arith.constant dense<0.000000e+00> : vector<1xf32>
    %140 = vector.multi_reduction <add>, %139, %cst_42 [0] : vector<16x1xf32> to vector<1xf32>
    %141 = vector.shape_cast %140 : vector<1xf32> to vector<1x1xf32>
    %142 = arith.mulf %137, %24 : vector<16x128xf32>
    %cst_43 = arith.constant dense<0.000000e+00> : vector<16xf32>
    %143 = vector.multi_reduction <add>, %142, %cst_43 [1] : vector<16x128xf32> to vector<16xf32>
    %144 = vector.shape_cast %143 : vector<16xf32> to vector<16x1xf32>
    %cst_44 = arith.constant dense<0.000000e+00> : vector<1xf32>
    %145 = vector.multi_reduction <add>, %144, %cst_44 [0] : vector<16x1xf32> to vector<1xf32>
    %146 = vector.shape_cast %145 : vector<1xf32> to vector<1x1xf32>
    %c0_i32_45 = arith.constant 0 : i32
    %147 = vector.broadcast %c0_i32_45 : i32 to vector<8x128xi32>
    %148 = arith.cmpi eq, %26, %147 : vector<8x128xi32>
    %c4_i32 = arith.constant 4 : i32
    %149 = vector.broadcast %c4_i32 : i32 to vector<8x128xi32>
    %150 = arith.cmpi eq, %25, %149 : vector<8x128xi32>
    %151 = arith.andi %148, %150 : vector<8x128xi1>
    %152 = vector.shape_cast %141 : vector<1x1xf32> to vector<1x1xf32>
    %153 = vector.broadcast %152 : vector<1x1xf32> to vector<8x128xf32>
    %154 = arith.select %151, %153, %133 : vector<8x128xi1>, vector<8x128xf32>
    %c1_i32_46 = arith.constant 1 : i32
    %155 = vector.broadcast %c1_i32_46 : i32 to vector<8x128xi32>
    %156 = arith.cmpi eq, %26, %155 : vector<8x128xi32>
    %c4_i32_47 = arith.constant 4 : i32
    %157 = vector.broadcast %c4_i32_47 : i32 to vector<8x128xi32>
    %158 = arith.cmpi eq, %25, %157 : vector<8x128xi32>
    %159 = arith.andi %156, %158 : vector<8x128xi1>
    %160 = vector.shape_cast %146 : vector<1x1xf32> to vector<1x1xf32>
    %161 = vector.broadcast %160 : vector<1x1xf32> to vector<8x128xf32>
    %162 = arith.select %159, %161, %154 : vector<8x128xi1>, vector<8x128xf32>
    %cst_48 = arith.constant 5.000000e-01 : f32
    %163 = vector.broadcast %cst_48 : f32 to vector<16x128xf32>
    %164 = arith.cmpf oge, %16, %163 : vector<16x128xf32>
    %165 = arith.extui %164 : vector<16x128xi1> to vector<16x128xi32>
    %166 = arith.sitofp %165 : vector<16x128xi32> to vector<16x128xf32>
    %cst_49 = arith.constant dense<0.000000e+00> : vector<16xf32>
    %167 = vector.multi_reduction <add>, %166, %cst_49 [1] : vector<16x128xf32> to vector<16xf32>
    %168 = vector.shape_cast %167 : vector<16xf32> to vector<16x1xf32>
    %cst_50 = arith.constant dense<0.000000e+00> : vector<1xf32>
    %169 = vector.multi_reduction <add>, %168, %cst_50 [0] : vector<16x1xf32> to vector<1xf32>
    %170 = vector.shape_cast %169 : vector<1xf32> to vector<1x1xf32>
    %171 = arith.mulf %166, %24 : vector<16x128xf32>
    %cst_51 = arith.constant dense<0.000000e+00> : vector<16xf32>
    %172 = vector.multi_reduction <add>, %171, %cst_51 [1] : vector<16x128xf32> to vector<16xf32>
    %173 = vector.shape_cast %172 : vector<16xf32> to vector<16x1xf32>
    %cst_52 = arith.constant dense<0.000000e+00> : vector<1xf32>
    %174 = vector.multi_reduction <add>, %173, %cst_52 [0] : vector<16x1xf32> to vector<1xf32>
    %175 = vector.shape_cast %174 : vector<1xf32> to vector<1x1xf32>
    %c0_i32_53 = arith.constant 0 : i32
    %176 = vector.broadcast %c0_i32_53 : i32 to vector<8x128xi32>
    %177 = arith.cmpi eq, %26, %176 : vector<8x128xi32>
    %c5_i32 = arith.constant 5 : i32
    %178 = vector.broadcast %c5_i32 : i32 to vector<8x128xi32>
    %179 = arith.cmpi eq, %25, %178 : vector<8x128xi32>
    %180 = arith.andi %177, %179 : vector<8x128xi1>
    %181 = vector.shape_cast %170 : vector<1x1xf32> to vector<1x1xf32>
    %182 = vector.broadcast %181 : vector<1x1xf32> to vector<8x128xf32>
    %183 = arith.select %180, %182, %162 : vector<8x128xi1>, vector<8x128xf32>
    %c1_i32_54 = arith.constant 1 : i32
    %184 = vector.broadcast %c1_i32_54 : i32 to vector<8x128xi32>
    %185 = arith.cmpi eq, %26, %184 : vector<8x128xi32>
    %c5_i32_55 = arith.constant 5 : i32
    %186 = vector.broadcast %c5_i32_55 : i32 to vector<8x128xi32>
    %187 = arith.cmpi eq, %25, %186 : vector<8x128xi32>
    %188 = arith.andi %185, %187 : vector<8x128xi1>
    %189 = vector.shape_cast %175 : vector<1x1xf32> to vector<1x1xf32>
    %190 = vector.broadcast %189 : vector<1x1xf32> to vector<8x128xf32>
    %191 = arith.select %188, %190, %183 : vector<8x128xi1>, vector<8x128xf32>
    %cst_56 = arith.constant 6.000000e-01 : f32
    %192 = vector.broadcast %cst_56 : f32 to vector<16x128xf32>
    %193 = arith.cmpf oge, %16, %192 : vector<16x128xf32>
    %194 = arith.extui %193 : vector<16x128xi1> to vector<16x128xi32>
    %195 = arith.sitofp %194 : vector<16x128xi32> to vector<16x128xf32>
    %cst_57 = arith.constant dense<0.000000e+00> : vector<16xf32>
    %196 = vector.multi_reduction <add>, %195, %cst_57 [1] : vector<16x128xf32> to vector<16xf32>
    %197 = vector.shape_cast %196 : vector<16xf32> to vector<16x1xf32>
    %cst_58 = arith.constant dense<0.000000e+00> : vector<1xf32>
    %198 = vector.multi_reduction <add>, %197, %cst_58 [0] : vector<16x1xf32> to vector<1xf32>
    %199 = vector.shape_cast %198 : vector<1xf32> to vector<1x1xf32>
    %200 = arith.mulf %195, %24 : vector<16x128xf32>
    %cst_59 = arith.constant dense<0.000000e+00> : vector<16xf32>
    %201 = vector.multi_reduction <add>, %200, %cst_59 [1] : vector<16x128xf32> to vector<16xf32>
    %202 = vector.shape_cast %201 : vector<16xf32> to vector<16x1xf32>
    %cst_60 = arith.constant dense<0.000000e+00> : vector<1xf32>
    %203 = vector.multi_reduction <add>, %202, %cst_60 [0] : vector<16x1xf32> to vector<1xf32>
    %204 = vector.shape_cast %203 : vector<1xf32> to vector<1x1xf32>
    %c0_i32_61 = arith.constant 0 : i32
    %205 = vector.broadcast %c0_i32_61 : i32 to vector<8x128xi32>
    %206 = arith.cmpi eq, %26, %205 : vector<8x128xi32>
    %c6_i32 = arith.constant 6 : i32
    %207 = vector.broadcast %c6_i32 : i32 to vector<8x128xi32>
    %208 = arith.cmpi eq, %25, %207 : vector<8x128xi32>
    %209 = arith.andi %206, %208 : vector<8x128xi1>
    %210 = vector.shape_cast %199 : vector<1x1xf32> to vector<1x1xf32>
    %211 = vector.broadcast %210 : vector<1x1xf32> to vector<8x128xf32>
    %212 = arith.select %209, %211, %191 : vector<8x128xi1>, vector<8x128xf32>
    %c1_i32_62 = arith.constant 1 : i32
    %213 = vector.broadcast %c1_i32_62 : i32 to vector<8x128xi32>
    %214 = arith.cmpi eq, %26, %213 : vector<8x128xi32>
    %c6_i32_63 = arith.constant 6 : i32
    %215 = vector.broadcast %c6_i32_63 : i32 to vector<8x128xi32>
    %216 = arith.cmpi eq, %25, %215 : vector<8x128xi32>
    %217 = arith.andi %214, %216 : vector<8x128xi1>
    %218 = vector.shape_cast %204 : vector<1x1xf32> to vector<1x1xf32>
    %219 = vector.broadcast %218 : vector<1x1xf32> to vector<8x128xf32>
    %220 = arith.select %217, %219, %212 : vector<8x128xi1>, vector<8x128xf32>
    %cst_64 = arith.constant 0.699999988 : f32
    %221 = vector.broadcast %cst_64 : f32 to vector<16x128xf32>
    %222 = arith.cmpf oge, %16, %221 : vector<16x128xf32>
    %223 = arith.extui %222 : vector<16x128xi1> to vector<16x128xi32>
    %224 = arith.sitofp %223 : vector<16x128xi32> to vector<16x128xf32>
    %cst_65 = arith.constant dense<0.000000e+00> : vector<16xf32>
    %225 = vector.multi_reduction <add>, %224, %cst_65 [1] : vector<16x128xf32> to vector<16xf32>
    %226 = vector.shape_cast %225 : vector<16xf32> to vector<16x1xf32>
    %cst_66 = arith.constant dense<0.000000e+00> : vector<1xf32>
    %227 = vector.multi_reduction <add>, %226, %cst_66 [0] : vector<16x1xf32> to vector<1xf32>
    %228 = vector.shape_cast %227 : vector<1xf32> to vector<1x1xf32>
    %229 = arith.mulf %224, %24 : vector<16x128xf32>
    %cst_67 = arith.constant dense<0.000000e+00> : vector<16xf32>
    %230 = vector.multi_reduction <add>, %229, %cst_67 [1] : vector<16x128xf32> to vector<16xf32>
    %231 = vector.shape_cast %230 : vector<16xf32> to vector<16x1xf32>
    %cst_68 = arith.constant dense<0.000000e+00> : vector<1xf32>
    %232 = vector.multi_reduction <add>, %231, %cst_68 [0] : vector<16x1xf32> to vector<1xf32>
    %233 = vector.shape_cast %232 : vector<1xf32> to vector<1x1xf32>
    %c0_i32_69 = arith.constant 0 : i32
    %234 = vector.broadcast %c0_i32_69 : i32 to vector<8x128xi32>
    %235 = arith.cmpi eq, %26, %234 : vector<8x128xi32>
    %c7_i32 = arith.constant 7 : i32
    %236 = vector.broadcast %c7_i32 : i32 to vector<8x128xi32>
    %237 = arith.cmpi eq, %25, %236 : vector<8x128xi32>
    %238 = arith.andi %235, %237 : vector<8x128xi1>
    %239 = vector.shape_cast %228 : vector<1x1xf32> to vector<1x1xf32>
    %240 = vector.broadcast %239 : vector<1x1xf32> to vector<8x128xf32>
    %241 = arith.select %238, %240, %220 : vector<8x128xi1>, vector<8x128xf32>
    %c1_i32_70 = arith.constant 1 : i32
    %242 = vector.broadcast %c1_i32_70 : i32 to vector<8x128xi32>
    %243 = arith.cmpi eq, %26, %242 : vector<8x128xi32>
    %c7_i32_71 = arith.constant 7 : i32
    %244 = vector.broadcast %c7_i32_71 : i32 to vector<8x128xi32>
    %245 = arith.cmpi eq, %25, %244 : vector<8x128xi32>
    %246 = arith.andi %243, %245 : vector<8x128xi1>
    %247 = vector.shape_cast %233 : vector<1x1xf32> to vector<1x1xf32>
    %248 = vector.broadcast %247 : vector<1x1xf32> to vector<8x128xf32>
    %249 = arith.select %246, %248, %241 : vector<8x128xi1>, vector<8x128xf32>
    %cst_72 = arith.constant 8.000000e-01 : f32
    %250 = vector.broadcast %cst_72 : f32 to vector<16x128xf32>
    %251 = arith.cmpf oge, %16, %250 : vector<16x128xf32>
    %252 = arith.extui %251 : vector<16x128xi1> to vector<16x128xi32>
    %253 = arith.sitofp %252 : vector<16x128xi32> to vector<16x128xf32>
    %cst_73 = arith.constant dense<0.000000e+00> : vector<16xf32>
    %254 = vector.multi_reduction <add>, %253, %cst_73 [1] : vector<16x128xf32> to vector<16xf32>
    %255 = vector.shape_cast %254 : vector<16xf32> to vector<16x1xf32>
    %cst_74 = arith.constant dense<0.000000e+00> : vector<1xf32>
    %256 = vector.multi_reduction <add>, %255, %cst_74 [0] : vector<16x1xf32> to vector<1xf32>
    %257 = vector.shape_cast %256 : vector<1xf32> to vector<1x1xf32>
    %258 = arith.mulf %253, %24 : vector<16x128xf32>
    %cst_75 = arith.constant dense<0.000000e+00> : vector<16xf32>
    %259 = vector.multi_reduction <add>, %258, %cst_75 [1] : vector<16x128xf32> to vector<16xf32>
    %260 = vector.shape_cast %259 : vector<16xf32> to vector<16x1xf32>
    %cst_76 = arith.constant dense<0.000000e+00> : vector<1xf32>
    %261 = vector.multi_reduction <add>, %260, %cst_76 [0] : vector<16x1xf32> to vector<1xf32>
    %262 = vector.shape_cast %261 : vector<1xf32> to vector<1x1xf32>
    %c0_i32_77 = arith.constant 0 : i32
    %263 = vector.broadcast %c0_i32_77 : i32 to vector<8x128xi32>
    %264 = arith.cmpi eq, %26, %263 : vector<8x128xi32>
    %c8_i32 = arith.constant 8 : i32
    %265 = vector.broadcast %c8_i32 : i32 to vector<8x128xi32>
    %266 = arith.cmpi eq, %25, %265 : vector<8x128xi32>
    %267 = arith.andi %264, %266 : vector<8x128xi1>
    %268 = vector.shape_cast %257 : vector<1x1xf32> to vector<1x1xf32>
    %269 = vector.broadcast %268 : vector<1x1xf32> to vector<8x128xf32>
    %270 = arith.select %267, %269, %249 : vector<8x128xi1>, vector<8x128xf32>
    %c1_i32_78 = arith.constant 1 : i32
    %271 = vector.broadcast %c1_i32_78 : i32 to vector<8x128xi32>
    %272 = arith.cmpi eq, %26, %271 : vector<8x128xi32>
    %c8_i32_79 = arith.constant 8 : i32
    %273 = vector.broadcast %c8_i32_79 : i32 to vector<8x128xi32>
    %274 = arith.cmpi eq, %25, %273 : vector<8x128xi32>
    %275 = arith.andi %272, %274 : vector<8x128xi1>
    %276 = vector.shape_cast %262 : vector<1x1xf32> to vector<1x1xf32>
    %277 = vector.broadcast %276 : vector<1x1xf32> to vector<8x128xf32>
    %278 = arith.select %275, %277, %270 : vector<8x128xi1>, vector<8x128xf32>
    %cst_80 = arith.constant 0.899999976 : f32
    %279 = vector.broadcast %cst_80 : f32 to vector<16x128xf32>
    %280 = arith.cmpf oge, %16, %279 : vector<16x128xf32>
    %281 = arith.extui %280 : vector<16x128xi1> to vector<16x128xi32>
    %282 = arith.sitofp %281 : vector<16x128xi32> to vector<16x128xf32>
    %cst_81 = arith.constant dense<0.000000e+00> : vector<16xf32>
    %283 = vector.multi_reduction <add>, %282, %cst_81 [1] : vector<16x128xf32> to vector<16xf32>
    %284 = vector.shape_cast %283 : vector<16xf32> to vector<16x1xf32>
    %cst_82 = arith.constant dense<0.000000e+00> : vector<1xf32>
    %285 = vector.multi_reduction <add>, %284, %cst_82 [0] : vector<16x1xf32> to vector<1xf32>
    %286 = vector.shape_cast %285 : vector<1xf32> to vector<1x1xf32>
    %287 = arith.mulf %282, %24 : vector<16x128xf32>
    %cst_83 = arith.constant dense<0.000000e+00> : vector<16xf32>
    %288 = vector.multi_reduction <add>, %287, %cst_83 [1] : vector<16x128xf32> to vector<16xf32>
    %289 = vector.shape_cast %288 : vector<16xf32> to vector<16x1xf32>
    %cst_84 = arith.constant dense<0.000000e+00> : vector<1xf32>
    %290 = vector.multi_reduction <add>, %289, %cst_84 [0] : vector<16x1xf32> to vector<1xf32>
    %291 = vector.shape_cast %290 : vector<1xf32> to vector<1x1xf32>
    %c0_i32_85 = arith.constant 0 : i32
    %292 = vector.broadcast %c0_i32_85 : i32 to vector<8x128xi32>
    %293 = arith.cmpi eq, %26, %292 : vector<8x128xi32>
    %c9_i32 = arith.constant 9 : i32
    %294 = vector.broadcast %c9_i32 : i32 to vector<8x128xi32>
    %295 = arith.cmpi eq, %25, %294 : vector<8x128xi32>
    %296 = arith.andi %293, %295 : vector<8x128xi1>
    %297 = vector.shape_cast %286 : vector<1x1xf32> to vector<1x1xf32>
    %298 = vector.broadcast %297 : vector<1x1xf32> to vector<8x128xf32>
    %299 = arith.select %296, %298, %278 : vector<8x128xi1>, vector<8x128xf32>
    %c1_i32_86 = arith.constant 1 : i32
    %300 = vector.broadcast %c1_i32_86 : i32 to vector<8x128xi32>
    %301 = arith.cmpi eq, %26, %300 : vector<8x128xi32>
    %c9_i32_87 = arith.constant 9 : i32
    %302 = vector.broadcast %c9_i32_87 : i32 to vector<8x128xi32>
    %303 = arith.cmpi eq, %25, %302 : vector<8x128xi32>
    %304 = arith.andi %301, %303 : vector<8x128xi1>
    %305 = vector.shape_cast %291 : vector<1x1xf32> to vector<1x1xf32>
    %306 = vector.broadcast %305 : vector<1x1xf32> to vector<8x128xf32>
    %307 = arith.select %304, %306, %299 : vector<8x128xi1>, vector<8x128xf32>
    %cst_88 = arith.constant 1.00000095 : f32
    %308 = vector.broadcast %cst_88 : f32 to vector<16x128xf32>
    %309 = arith.cmpf oge, %16, %308 : vector<16x128xf32>
    %310 = arith.extui %309 : vector<16x128xi1> to vector<16x128xi32>
    %311 = arith.sitofp %310 : vector<16x128xi32> to vector<16x128xf32>
    %cst_89 = arith.constant dense<0.000000e+00> : vector<16xf32>
    %312 = vector.multi_reduction <add>, %311, %cst_89 [1] : vector<16x128xf32> to vector<16xf32>
    %313 = vector.shape_cast %312 : vector<16xf32> to vector<16x1xf32>
    %cst_90 = arith.constant dense<0.000000e+00> : vector<1xf32>
    %314 = vector.multi_reduction <add>, %313, %cst_90 [0] : vector<16x1xf32> to vector<1xf32>
    %315 = vector.shape_cast %314 : vector<1xf32> to vector<1x1xf32>
    %316 = arith.mulf %311, %24 : vector<16x128xf32>
    %cst_91 = arith.constant dense<0.000000e+00> : vector<16xf32>
    %317 = vector.multi_reduction <add>, %316, %cst_91 [1] : vector<16x128xf32> to vector<16xf32>
    %318 = vector.shape_cast %317 : vector<16xf32> to vector<16x1xf32>
    %cst_92 = arith.constant dense<0.000000e+00> : vector<1xf32>
    %319 = vector.multi_reduction <add>, %318, %cst_92 [0] : vector<16x1xf32> to vector<1xf32>
    %320 = vector.shape_cast %319 : vector<1xf32> to vector<1x1xf32>
    %c0_i32_93 = arith.constant 0 : i32
    %321 = vector.broadcast %c0_i32_93 : i32 to vector<8x128xi32>
    %322 = arith.cmpi eq, %26, %321 : vector<8x128xi32>
    %c10_i32 = arith.constant 10 : i32
    %323 = vector.broadcast %c10_i32 : i32 to vector<8x128xi32>
    %324 = arith.cmpi eq, %25, %323 : vector<8x128xi32>
    %325 = arith.andi %322, %324 : vector<8x128xi1>
    %326 = vector.shape_cast %315 : vector<1x1xf32> to vector<1x1xf32>
    %327 = vector.broadcast %326 : vector<1x1xf32> to vector<8x128xf32>
    %328 = arith.select %325, %327, %307 : vector<8x128xi1>, vector<8x128xf32>
    %c1_i32_94 = arith.constant 1 : i32
    %329 = vector.broadcast %c1_i32_94 : i32 to vector<8x128xi32>
    %330 = arith.cmpi eq, %26, %329 : vector<8x128xi32>
    %c10_i32_95 = arith.constant 10 : i32
    %331 = vector.broadcast %c10_i32_95 : i32 to vector<8x128xi32>
    %332 = arith.cmpi eq, %25, %331 : vector<8x128xi32>
    %333 = arith.andi %330, %332 : vector<8x128xi1>
    %334 = vector.shape_cast %320 : vector<1x1xf32> to vector<1x1xf32>
    %335 = vector.broadcast %334 : vector<1x1xf32> to vector<8x128xf32>
    %336 = arith.select %333, %335, %328 : vector<8x128xi1>, vector<8x128xf32>
    %c0_96 = arith.constant 0 : index
    %c0_97 = arith.constant 0 : index
    %c0_98 = arith.constant 0 : index
    %337 = vector.load %arg3[%c0_96, %c0_97, %c0_98] : memref<1x8x128xf32, #tpu.memory_space<vmem>>, vector<1x8x128xf32>
    %338 = vector.shape_cast %337 : vector<1x8x128xf32> to vector<8x128xf32>
    %339 = vector.shape_cast %336 : vector<8x128xf32> to vector<1x8x128xf32>
    tpu.vector_store %arg3[%c0_96, %c0_97, %c0_98], %339 {strides = array<i32>} : memref<1x8x128xf32, #tpu.memory_space<vmem>>, vector<1x8x128xf32>,
    return
  }
  func.func @transform_0(%arg0: i32) -> (i32, i32) {
    %c0_i32 = arith.constant 0 : i32
    %c0_i32_0 = arith.constant 0 : i32
    return %arg0, %c0_i32 : i32, i32
  }
  func.func @transform_1(%arg0: i32) -> (i32, i32) {
    %c0_i32 = arith.constant 0 : i32
    %c0_i32_0 = arith.constant 0 : i32
    return %arg0, %c0_i32 : i32, i32
  }
  func.func @transform_2(%arg0: i32) -> (i32, i32, i32) {
    %c0_i32 = arith.constant 0 : i32
    %c0_i32_0 = arith.constant 0 : i32
    %c0_i32_1 = arith.constant 0 : i32
    return %arg0, %c0_i32, %c0_i32_0 : i32, i32, i32
  }
}

</mosaic_0001>

<llo_original>
// kernel: tpu_custom_call.1
$region0: #{tpu_custom_call.1}
  #allocation0 [shape = 'u32[]', space=smem, size = 0x4, offset = 0x4, fixed_abs, tag = 'smem constant byte address 0x4 - core index']
  #allocation1 [shape = 'u32[72,128]{1,0:T(1,128)}', space=vmem, size = 0x9000, scoped, tag = 'internal scratch']
  %s0 = inlined_call_operand.hbm [shape: f32[64,128], index: 0, kind: input, shape index: {}]
  %s1 = inlined_call_operand.hbm [shape: f32[64,128], index: 1, kind: input, shape index: {}]
  %s2 = inlined_call_operand.hbm [shape: f32[4,8,128], index: 2, kind: output, shape index: {}]
  %s3 = sld [smem:[#allocation0]]
  $region49: #{tpu_custom_call.1} parent=0
    _
  %s5 = ssub.s32 1, %s3
  %s6 = scalar_select 0, %s5, %s3
  $region1: #{tpu_custom_call.1} parent=0
    #allocation2 [shape = 'u8[16384]{0}', space=vmem, size = 0x4000, scoped, tag = 'input window, operand 0']
    #allocation3 [shape = 's32[2]{0}', space=sflag, size = 0x8, scoped, tag = 'scoped memory for tpu_custom_call.1']
    #allocation4 [shape = 's32[2]{0}', space=sflag, size = 0x8, scoped, tag = 'scoped memory for tpu_custom_call.1']
    #allocation5 [shape = 'u8[16384]{0}', space=vmem, size = 0x4000, scoped, tag = 'input window, operand 1']
    #allocation6 [shape = 's32[2]{0}', space=sflag, size = 0x8, scoped, tag = 'scoped memory for tpu_custom_call.1']
    #allocation7 [shape = 'u8[8192]{0}', space=vmem, size = 0x2000, scoped, tag = 'output window, operand 0']
    %7 = vsyncpa [#allocation3], 0
    %s8 = scalar_lea.sflag [#allocation3], 1
    %9 = vsyncpa %s8, 0
    %10 = vsyncpa [#allocation6], 0
    %s11 = scalar_lea.sflag [#allocation6], 1
    %12 = vsyncpa %s11, 0
    %13 = vsyncpa [#allocation4], 0
    %s14 = scalar_lea.sflag [#allocation4], 1
    %15 = vsyncpa %s14, 0
    loop: start=0, step=1, limit=6
    $region2: #{tpu_custom_call.1} parent=1 // loop_pre_header
      _
    $region3: #{tpu_custom_call.1} parent=1 // loop_header
      %s17 = sphi 0, %s21
      %p18 = scmp.ge.s32.totalorder %s17, 6
      %s27 = sphi 0, %s29
      %s30 = sphi 0, %s27
      %s31 = sphi 0, %s30
      %s47 = sphi 0, %s31
      %s53 = sphi 0, %s55
      %s56 = sphi 0, %s53
      %s57 = sphi 0, %s56
      %s73 = sphi 0, %s57
      %s79 = sphi 0, %s81
      %s82 = sphi 0, %s79
      %s83 = sphi 0, %s82
      %s99 = sphi 0, %s83
    $region4: #{tpu_custom_call.1} parent=1 // loop_header_branch
      %20 = sbr.rel (%p18) target = $region8
    $region5: #{tpu_custom_call.1} parent=1 // loop_body
      %s22 = ssub.s32 %s17, 1
      %s23 = ssub.s32 %s17, 2
      %s24 = sadd.s32 %s17, 1
      %s25 = ssub.s32 %s17, %s24
      %p26 = scmp.eq.s32.totalorder %s25, 0
      %s28 = sadd.s32 %s27, 1
      %s29 = scalar_select %p26, %s27, %s28
      %p32 = pneg %p26
      %p33 = scmp.eq.s32.totalorder %s17, 3
      %p34 = por %p32, %p33
      %p35 = scmp.ne.s32.totalorder %s27, %s30
      %p36 = scmp.eq.s32.totalorder %s17, 0
      %p37 = por %p35, %p36
      %p38 = scmp.ne.s32.totalorder %s27, %s30
      %p39 = scmp.eq.s32.totalorder %s22, 3
      %p40 = por %p38, %p39
      %p41 = scmp.ne.s32.totalorder %s30, %s31
      %p42 = scmp.eq.s32.totalorder %s22, 0
      %p43 = por %p41, %p42
      %p44 = scmp.ne.s32.totalorder %s30, %s31
      %p45 = scmp.eq.s32.totalorder %s23, 3
      %p46 = por %p44, %p45
      %p48 = scmp.ne.s32.totalorder %s31, %s47
      %p49 = scmp.eq.s32.totalorder %s23, 0
      %p50 = por %p48, %p49
      %s51 = ssub.s32 %s17, %s24
      %p52 = scmp.eq.s32.totalorder %s51, 0
      %s54 = sadd.s32 %s53, 1
      %s55 = scalar_select %p52, %s53, %s54
      %p58 = pneg %p52
      %p59 = scmp.eq.s32.totalorder %s17, 3
      %p60 = por %p58, %p59
      %p61 = scmp.ne.s32.totalorder %s53, %s56
      %p62 = scmp.eq.s32.totalorder %s17, 0
      %p63 = por %p61, %p62
      %p64 = scmp.ne.s32.totalorder %s53, %s56
      %p65 = scmp.eq.s32.totalorder %s22, 3
      %p66 = por %p64, %p65
      %p67 = scmp.ne.s32.totalorder %s56, %s57
      %p68 = scmp.eq.s32.totalorder %s22, 0
      %p69 = por %p67, %p68
      %p70 = scmp.ne.s32.totalorder %s56, %s57
      %p71 = scmp.eq.s32.totalorder %s23, 3
      %p72 = por %p70, %p71
      %p74 = scmp.ne.s32.totalorder %s57, %s73
      %p75 = scmp.eq.s32.totalorder %s23, 0
      %p76 = por %p74, %p75
      %s77 = ssub.s32 %s17, %s24
      %p78 = scmp.eq.s32.totalorder %s77, 0
      %s80 = sadd.s32 %s79, 1
      %s81 = scalar_select %p78, %s79, %s80
      %p84 = pneg %p78
      %p85 = scmp.eq.s32.totalorder %s17, 3
      %p86 = por %p84, %p85
      %p87 = scmp.ne.s32.totalorder %s79, %s82
      %p88 = scmp.eq.s32.totalorder %s17, 0
      %p89 = por %p87, %p88
      %p90 = scmp.ne.s32.totalorder %s79, %s82
      %p91 = scmp.eq.s32.totalorder %s22, 3
      %p92 = por %p90, %p91
      %p93 = scmp.ne.s32.totalorder %s82, %s83
      %p94 = scmp.eq.s32.totalorder %s22, 0
      %p95 = por %p93, %p94
      %p96 = scmp.ne.s32.totalorder %s82, %s83
      %p97 = scmp.eq.s32.totalorder %s23, 3
      %p98 = por %p96, %p97
      %p100 = scmp.ne.s32.totalorder %s83, %s99
      %p101 = scmp.eq.s32.totalorder %s23, 0
      %p102 = por %p100, %p101
      %p103 = scmp.le.s32.totalorder 1, %s17
      %p104 = scmp.lt.s32.totalorder %s17, 5
      %p105 = pnand %p103, %p104
      %p106 = pneg %p105
      // Predicated region
      $region9: #{tpu_custom_call.1} parent=5 // pred_check
        _
      $region10: #{tpu_custom_call.1} parent=5 // pred_check_branch
        %108 = sbr.rel (%p105) target = $region12
      $region11: #{tpu_custom_call.1} parent=5 // pred_region
        %s109 = ssub.s32 %s17, 1
      $region12: #{tpu_custom_call.1} parent=5 // pred_fallthru
        _
      %p110 = scmp.lt.s32.totalorder %s17, 4
      // Predicated region
      $region13: #{tpu_custom_call.1} parent=5 // pred_check
        %p111 = pneg %p110
      $region14: #{tpu_custom_call.1} parent=5 // pred_check_branch
        %113 = sbr.rel (%p111) target = $region16
      $region15: #{tpu_custom_call.1} parent=5 // pred_region
        // Predicated region
        $region17: #{tpu_custom_call.1} parent=15 // pred_check
          %p114 = pneg %p37
        $region18: #{tpu_custom_call.1} parent=15 // pred_check_branch
          %116 = sbr.rel (%p114) target = $region20
        $region19: #{tpu_custom_call.1} parent=15 // pred_region
          %s117 = sand.u32 %s27, 1
          %s118 = scalar_lea.sflag [#allocation3], %s117
          %s119 = sand.u32 %s27, 1
          %s120 = smul.addr %s119, 16
          %s121 = scalar_lea.vmem [#allocation2], %s120
          %s122 = smul.u32 2, %s17
          %124 = vsyncadd %s118, 0
          %s125 = smul.addr %s122, 8
          %s126 = scalar_lea.hbm %s0, %s125
          %s127 = sshll.u32 %s126, 4
          %s128 = int_to_ptr.hbm [resolvable:$true] %s127
          %s129 = sshll.u32 %s121, 4
          %s130 = int_to_ptr.vmem [resolvable:$true] %s129
          %135 = dma.hbm_to_vmem [thread:$0]  %s128, 256, %s130, %s118, 128, 128, 8
        $region20: #{tpu_custom_call.1} parent=15 // pred_fallthru
          _
        // Predicated region
        $region21: #{tpu_custom_call.1} parent=15 // pred_check
          %p136 = pneg %p63
        $region22: #{tpu_custom_call.1} parent=15 // pred_check_branch
          %138 = sbr.rel (%p136) target = $region24
        $region23: #{tpu_custom_call.1} parent=15 // pred_region
          %s139 = sand.u32 %s53, 1
          %s140 = scalar_lea.sflag [#allocation6], %s139
          %s141 = sand.u32 %s53, 1
          %s142 = smul.addr %s141, 16
          %s143 = scalar_lea.vmem [#allocation5], %s142
          %s144 = smul.u32 2, %s17
          %146 = vsyncadd %s140, 0
          %s147 = smul.addr %s144, 8
          %s148 = scalar_lea.hbm %s1, %s147
          %s149 = sshll.u32 %s148, 4
          %s150 = int_to_ptr.hbm [resolvable:$true] %s149
          %s151 = sshll.u32 %s143, 4
          %s152 = int_to_ptr.vmem [resolvable:$true] %s151
          %157 = dma.hbm_to_vmem [thread:$0]  %s150, 256, %s152, %s140, 128, 128, 8
        $region24: #{tpu_custom_call.1} parent=15 // pred_fallthru
          _
      $region16: #{tpu_custom_call.1} parent=5 // pred_fallthru
        _
      %p158 = scmp.le.s32.totalorder 1, %s17
      %p159 = scmp.lt.s32.totalorder %s17, 5
      %p160 = pnand %p158, %p159
      %p161 = pneg %p160
      // Predicated region
      $region25: #{tpu_custom_call.1} parent=5 // pred_check
        _
      $region26: #{tpu_custom_call.1} parent=5 // pred_check_branch
        %163 = sbr.rel (%p160) target = $region28
      $region27: #{tpu_custom_call.1} parent=5 // pred_region
        %s164 = ssub.s32 %s17, 1
        %s165 = sand.u32 %s30, 1
        %s166 = scalar_lea.sflag [#allocation3], %s165
        %s167 = sand.u32 %s30, 1
        %s168 = smul.addr %s167, 16
        %s169 = scalar_lea.vmem [#allocation2], %s168
        // Predicated region
        $region29: #{tpu_custom_call.1} parent=27 // pred_check
          %p170 = pneg %p43
        $region30: #{tpu_custom_call.1} parent=27 // pred_check_branch
          %172 = sbr.rel (%p170) target = $region32
        $region31: #{tpu_custom_call.1} parent=27 // pred_region
          %174 = dma.done %s166, 256
        $region32: #{tpu_custom_call.1} parent=27 // pred_fallthru
          _
        %s175 = sand.u32 %s56, 1
        %s176 = scalar_lea.sflag [#allocation6], %s175
        %s177 = sand.u32 %s56, 1
        %s178 = smul.addr %s177, 16
        %s179 = scalar_lea.vmem [#allocation5], %s178
        // Predicated region
        $region33: #{tpu_custom_call.1} parent=27 // pred_check
          %p180 = pneg %p69
        $region34: #{tpu_custom_call.1} parent=27 // pred_check_branch
          %182 = sbr.rel (%p180) target = $region36
        $region35: #{tpu_custom_call.1} parent=27 // pred_region
          %184 = dma.done %s176, 256
        $region36: #{tpu_custom_call.1} parent=27 // pred_fallthru
          _
        %s185 = sand.u32 %s30, 1
        %s186 = scalar_lea.sflag [#allocation3], %s185
        %s187 = sand.u32 %s30, 1
        %s188 = smul.addr %s187, 16
        %s189 = scalar_lea.vmem [#allocation2], %s188
        %p190 = pneg %p43
        %p191 = pneg %p40
        %s192 = sand.u32 %s56, 1
        %s193 = scalar_lea.sflag [#allocation6], %s192
        %s194 = sand.u32 %s56, 1
        %s195 = smul.addr %s194, 16
        %s196 = scalar_lea.vmem [#allocation5], %s195
        %p197 = pneg %p69
        %p198 = pneg %p66
        %p199 = pneg %p95
        %p200 = pneg %p92
        %s201 = sand.u32 %s82, 1
        %s202 = scalar_lea.sflag [#allocation4], %s201
        %s203 = sand.u32 %s82, 1
        %s204 = smul.addr %s203, 8
        %s205 = scalar_lea.vmem [#allocation7], %s204
        %s206 = smul.u32 2, %s22
        %s207 = smul.u32 2, %s22
        %v208 = vld [vmem:[%s169] sm:$0xff]
        %v209 = vld [vmem:[%s169 + $0x8] sm:$0xff]
        %v210 = vld [vmem:[%s179] sm:$0xff]
        %v211 = vld [vmem:[%s179 + $0x8] sm:$0xff]
        %v212 = vand.u32 2147483647, %v208
        %v213 = vand.u32 2147483647, %v209
        %v214 = vsub.f32 0.0, %v212
        %v215 = vsub.f32 0.0, %v213
        %v216 = vmul.f32 %v214, 1.442695
        %v217 = vpow.pop %v216
        %v218 = vmul.f32 %v215, 1.442695
        %v219 = vpow.pop %v218
        %v220 = vadd.f32 %v217, 1.0
        %v221 = vadd.f32 %v219, 1.0
        %v222 = vrcp.pop %v220
        %v223 = vmul.f32 %v220, %v222
        %v224 = vsub.f32 1.0, %v223
        %v225 = vmul.f32 %v222, %v224
        %v226 = vadd.f32 %v222, %v225
        %vm227 = vweird.f32 %v220
        %vm228 = vweird.f32 %v222
        %vm229 = vmor %vm227, %vm228
        %v230 = vsel %vm229, %v222, %v226
        %v231 = vand.u32 2147483647, %v220
        %vm232 = vcmp.eq.f32.partialorder %v231, 8.507059e+37
        %v233 = vand.u32 %v220, 2147483648
        %v234 = vor.u32 1.1754944e-38, %v233
        %v235 = vsel %vm232, %v234, %v230
        %v236 = vmul.f32 1.0, %v235
        %v237 = vrcp.pop %v221
        %v238 = vmul.f32 %v221, %v237
        %v239 = vsub.f32 1.0, %v238
        %v240 = vmul.f32 %v237, %v239
        %v241 = vadd.f32 %v237, %v240
        %vm242 = vweird.f32 %v221
        %vm243 = vweird.f32 %v237
        %vm244 = vmor %vm242, %vm243
        %v245 = vsel %vm244, %v237, %v241
        %v246 = vand.u32 2147483647, %v221
        %vm247 = vcmp.eq.f32.partialorder %v246, 8.507059e+37
        %v248 = vand.u32 %v221, 2147483648
        %v249 = vor.u32 1.1754944e-38, %v248
        %v250 = vsel %vm247, %v249, %v245
        %v251 = vmul.f32 1.0, %v250
        %vm252 = vcmp.ge.f32.partialorder %v208, 0.0
        %vm253 = vcmp.ge.f32.partialorder %v209, 0.0
        %v254 = vsub.f32 1.0, %v236
        %v255 = vsub.f32 1.0, %v251
        %v256 = vsel %vm252, %v236, %v254
        %v257 = vsel %vm253, %v251, %v255
        %v258 = vsub.f32 %v256, %v210
        %v259 = vsub.f32 %v257, %v211
        %v260 = vand.u32 2147483647, %v258
        %v261 = vand.u32 2147483647, %v259
        %v262 = vmax.f32 %v208, 0.0
        %v263 = vmax.f32 %v209, 0.0
        %v264 = vmul.f32 %v208, %v210
        %v265 = vmul.f32 %v209, %v211
        %v266 = vsub.f32 %v262, %v264
        %v267 = vsub.f32 %v263, %v265
        %v268 = vlog2.pop %v220
        %v269 = vmul.f32 %v268, 0.6931472
        %v270 = vlog2.pop %v221
        %v271 = vmul.f32 %v270, 0.6931472
        %v272 = vadd.f32 %v266, %v269
        %v273 = vadd.f32 %v267, %v271
        %v274 = vlaneseq
        %v275 = vand.u32 %v274, 127
        %v276 = vlaneseq
        %v277 = vshrl.u32 %v276, 7
        %278 = vadd.xlane.f32.xlu0 %v272
        %v279 = vpop.xlane.xlu0 %278
        %280 = vadd.xlane.f32.xlu0 %v273
        %v281 = vpop.xlane.xlu0 %280
        %v282 = vadd.f32 %v279, %v281
        %v283 = vrot.slane %v282, 4
        %v284 = vadd.f32 %v282, %v283
        %v285 = vrot.slane %v284, 2
        %v286 = vadd.f32 %v284, %v285
        %v287 = vrot.slane %v286, 1
        %v288 = vadd.f32 %v286, %v287
        %vm289 = vcmp.eq.s32.totalorder %v277, 0
        %vm290 = vcmp.eq.s32.totalorder %v275, 0
        %vm291 = vmand %vm289, %vm290
        %v292 = vsel %vm291, 2048.0, 0.0
        %vm293 = vcmp.eq.s32.totalorder %v277, 1
        %vm294 = vmand %vm293, %vm290
        %v295 = vsel %vm294, %v288, %v292
        %vm296 = vcmp.ge.f32.partialorder %v260, 0.1
        %vm297 = vcmp.ge.f32.partialorder %v261, 0.1
        %v298 = vsel %vm296, 1, 0
        %v299 = vsel %vm297, 1, 0
        %v300 = vcvt.s32.f32 %v298
        %v301 = vcvt.s32.f32 %v299
        %302 = vadd.xlane.f32.xlu0 %v300
        %v303 = vpop.xlane.xlu0 %302
        %304 = vadd.xlane.f32.xlu0 %v301
        %v305 = vpop.xlane.xlu0 %304
        %v306 = vadd.f32 %v303, %v305
        %v307 = vrot.slane %v306, 4
        %v308 = vadd.f32 %v306, %v307
        %v309 = vrot.slane %v308, 2
        %v310 = vadd.f32 %v308, %v309
        %v311 = vrot.slane %v310, 1
        %v312 = vadd.f32 %v310, %v311
        %v313 = vmul.f32 %v300, %v272
        %v314 = vmul.f32 %v301, %v273
        %315 = vadd.xlane.f32.xlu0 %v313
        %v316 = vpop.xlane.xlu0 %315
        %317 = vadd.xlane.f32.xlu0 %v314
        %v318 = vpop.xlane.xlu0 %317
        %v319 = vadd.f32 %v316, %v318
        %v320 = vrot.slane %v319, 4
        %v321 = vadd.f32 %v319, %v320
        %v322 = vrot.slane %v321, 2
        %v323 = vadd.f32 %v321, %v322
        %v324 = vrot.slane %v323, 1
        %v325 = vadd.f32 %v323, %v324
        %vm326 = vcmp.eq.s32.totalorder %v275, 1
        %vm327 = vmand %vm289, %vm326
        %v328 = vsel %vm327, %v312, %v295
        %vm329 = vmand %vm293, %vm326
        %v330 = vsel %vm329, %v325, %v328
        %vm331 = vcmp.ge.f32.partialorder %v260, 0.2
        %vm332 = vcmp.ge.f32.partialorder %v261, 0.2
        %v333 = vsel %vm331, 1, 0
        %v334 = vsel %vm332, 1, 0
        %v335 = vcvt.s32.f32 %v333
        %v336 = vcvt.s32.f32 %v334
        %337 = vadd.xlane.f32.xlu0 %v335
        %v338 = vpop.xlane.xlu0 %337
        %339 = vadd.xlane.f32.xlu0 %v336
        %v340 = vpop.xlane.xlu0 %339
        %v341 = vadd.f32 %v338, %v340
        %v342 = vrot.slane %v341, 4
        %v343 = vadd.f32 %v341, %v342
        %v344 = vrot.slane %v343, 2
        %v345 = vadd.f32 %v343, %v344
        %v346 = vrot.slane %v345, 1
        %v347 = vadd.f32 %v345, %v346
        %v348 = vmul.f32 %v335, %v272
        %v349 = vmul.f32 %v336, %v273
        %350 = vadd.xlane.f32.xlu0 %v348
        %v351 = vpop.xlane.xlu0 %350
        %352 = vadd.xlane.f32.xlu0 %v349
        %v353 = vpop.xlane.xlu0 %352
        %v354 = vadd.f32 %v351, %v353
        %v355 = vrot.slane %v354, 4
        %v356 = vadd.f32 %v354, %v355
        %v357 = vrot.slane %v356, 2
        %v358 = vadd.f32 %v356, %v357
        %v359 = vrot.slane %v358, 1
        %v360 = vadd.f32 %v358, %v359
        %vm361 = vcmp.eq.s32.totalorder %v275, 2
        %vm362 = vmand %vm289, %vm361
        %v363 = vsel %vm362, %v347, %v330
        %vm364 = vmand %vm293, %vm361
        %v365 = vsel %vm364, %v360, %v363
        %vm366 = vcmp.ge.f32.partialorder %v260, 0.3
        %vm367 = vcmp.ge.f32.partialorder %v261, 0.3
        %v368 = vsel %vm366, 1, 0
        %v369 = vsel %vm367, 1, 0
        %v370 = vcvt.s32.f32 %v368
        %v371 = vcvt.s32.f32 %v369
        %372 = vadd.xlane.f32.xlu0 %v370
        %v373 = vpop.xlane.xlu0 %372
        %374 = vadd.xlane.f32.xlu0 %v371
        %v375 = vpop.xlane.xlu0 %374
        %v376 = vadd.f32 %v373, %v375
        %v377 = vrot.slane %v376, 4
        %v378 = vadd.f32 %v376, %v377
        %v379 = vrot.slane %v378, 2
        %v380 = vadd.f32 %v378, %v379
        %v381 = vrot.slane %v380, 1
        %v382 = vadd.f32 %v380, %v381
        %v383 = vmul.f32 %v370, %v272
        %v384 = vmul.f32 %v371, %v273
        %385 = vadd.xlane.f32.xlu0 %v383
        %v386 = vpop.xlane.xlu0 %385
        %387 = vadd.xlane.f32.xlu0 %v384
        %v388 = vpop.xlane.xlu0 %387
        %v389 = vadd.f32 %v386, %v388
        %v390 = vrot.slane %v389, 4
        %v391 = vadd.f32 %v389, %v390
        %v392 = vrot.slane %v391, 2
        %v393 = vadd.f32 %v391, %v392
        %v394 = vrot.slane %v393, 1
        %v395 = vadd.f32 %v393, %v394
        %vm396 = vcmp.eq.s32.totalorder %v275, 3
        %vm397 = vmand %vm289, %vm396
        %v398 = vsel %vm397, %v382, %v365
        %vm399 = vmand %vm293, %vm396
        %v400 = vsel %vm399, %v395, %v398
        %vm401 = vcmp.ge.f32.partialorder %v260, 0.4
        %vm402 = vcmp.ge.f32.partialorder %v261, 0.4
        %v403 = vsel %vm401, 1, 0
        %v404 = vsel %vm402, 1, 0
        %v405 = vcvt.s32.f32 %v403
        %v406 = vcvt.s32.f32 %v404
        %407 = vadd.xlane.f32.xlu0 %v405
        %v408 = vpop.xlane.xlu0 %407
        %409 = vadd.xlane.f32.xlu0 %v406
        %v410 = vpop.xlane.xlu0 %409
        %v411 = vadd.f32 %v408, %v410
        %v412 = vrot.slane %v411, 4
        %v413 = vadd.f32 %v411, %v412
        %v414 = vrot.slane %v413, 2
        %v415 = vadd.f32 %v413, %v414
        %v416 = vrot.slane %v415, 1
        %v417 = vadd.f32 %v415, %v416
        %v418 = vmul.f32 %v405, %v272
        %v419 = vmul.f32 %v406, %v273
        %420 = vadd.xlane.f32.xlu0 %v418
        %v421 = vpop.xlane.xlu0 %420
        %422 = vadd.xlane.f32.xlu0 %v419
        %v423 = vpop.xlane.xlu0 %422
        %v424 = vadd.f32 %v421, %v423
        %v425 = vrot.slane %v424, 4
        %v426 = vadd.f32 %v424, %v425
        %v427 = vrot.slane %v426, 2
        %v428 = vadd.f32 %v426, %v427
        %v429 = vrot.slane %v428, 1
        %v430 = vadd.f32 %v428, %v429
        %vm431 = vcmp.eq.s32.totalorder %v275, 4
        %vm432 = vmand %vm289, %vm431
        %v433 = vsel %vm432, %v417, %v400
        %vm434 = vmand %vm293, %vm431
        %v435 = vsel %vm434, %v430, %v433
        %vm436 = vcmp.ge.f32.partialorder %v260, 0.5
        %vm437 = vcmp.ge.f32.partialorder %v261, 0.5
        %v438 = vsel %vm436, 1, 0
        %v439 = vsel %vm437, 1, 0
        %v440 = vcvt.s32.f32 %v438
        %v441 = vcvt.s32.f32 %v439
        %442 = vadd.xlane.f32.xlu0 %v440
        %v443 = vpop.xlane.xlu0 %442
        %444 = vadd.xlane.f32.xlu0 %v441
        %v445 = vpop.xlane.xlu0 %444
        %v446 = vadd.f32 %v443, %v445
        %v447 = vrot.slane %v446, 4
        %v448 = vadd.f32 %v446, %v447
        %v449 = vrot.slane %v448, 2
        %v450 = vadd.f32 %v448, %v449
        %v451 = vrot.slane %v450, 1
        %v452 = vadd.f32 %v450, %v451
        %v453 = vmul.f32 %v440, %v272
        %v454 = vmul.f32 %v441, %v273
        %455 = vadd.xlane.f32.xlu0 %v453
        %v456 = vpop.xlane.xlu0 %455
        %457 = vadd.xlane.f32.xlu0 %v454
        %v458 = vpop.xlane.xlu0 %457
        %v459 = vadd.f32 %v456, %v458
        %v460 = vrot.slane %v459, 4
        %v461 = vadd.f32 %v459, %v460
        %v462 = vrot.slane %v461, 2
        %v463 = vadd.f32 %v461, %v462
        %v464 = vrot.slane %v463, 1
        %v465 = vadd.f32 %v463, %v464
        %vm466 = vcmp.eq.s32.totalorder %v275, 5
        %vm467 = vmand %vm289, %vm466
        %v468 = vsel %vm467, %v452, %v435
        %vm469 = vmand %vm293, %vm466
        %v470 = vsel %vm469, %v465, %v468
        %vm471 = vcmp.ge.f32.partialorder %v260, 0.6
        %vm472 = vcmp.ge.f32.partialorder %v261, 0.6
        %v473 = vsel %vm471, 1, 0
        %v474 = vsel %vm472, 1, 0
        %v475 = vcvt.s32.f32 %v473
        %v476 = vcvt.s32.f32 %v474
        %477 = vadd.xlane.f32.xlu0 %v475
        %v478 = vpop.xlane.xlu0 %477
        %479 = vadd.xlane.f32.xlu0 %v476
        %v480 = vpop.xlane.xlu0 %479
        %v481 = vadd.f32 %v478, %v480
        %v482 = vrot.slane %v481, 4
        %v483 = vadd.f32 %v481, %v482
        %v484 = vrot.slane %v483, 2
        %v485 = vadd.f32 %v483, %v484
        %v486 = vrot.slane %v485, 1
        %v487 = vadd.f32 %v485, %v486
        %v488 = vmul.f32 %v475, %v272
        %v489 = vmul.f32 %v476, %v273
        %490 = vadd.xlane.f32.xlu0 %v488
        %v491 = vpop.xlane.xlu0 %490
        %492 = vadd.xlane.f32.xlu0 %v489
        %v493 = vpop.xlane.xlu0 %492
        %v494 = vadd.f32 %v491, %v493
        %v495 = vrot.slane %v494, 4
        %v496 = vadd.f32 %v494, %v495
        %v497 = vrot.slane %v496, 2
        %v498 = vadd.f32 %v496, %v497
        %v499 = vrot.slane %v498, 1
        %v500 = vadd.f32 %v498, %v499
        %vm501 = vcmp.eq.s32.totalorder %v275, 6
        %vm502 = vmand %vm289, %vm501
        %v503 = vsel %vm502, %v487, %v470
        %vm504 = vmand %vm293, %vm501
        %v505 = vsel %vm504, %v500, %v503
        %vm506 = vcmp.ge.f32.partialorder %v260, 0.7
        %vm507 = vcmp.ge.f32.partialorder %v261, 0.7
        %v508 = vsel %vm506, 1, 0
        %v509 = vsel %vm507, 1, 0
        %v510 = vcvt.s32.f32 %v508
        %v511 = vcvt.s32.f32 %v509
        %512 = vadd.xlane.f32.xlu0 %v510
        %v513 = vpop.xlane.xlu0 %512
        %514 = vadd.xlane.f32.xlu0 %v511
        %v515 = vpop.xlane.xlu0 %514
        %v516 = vadd.f32 %v513, %v515
        %v517 = vrot.slane %v516, 4
        %v518 = vadd.f32 %v516, %v517
        %v519 = vrot.slane %v518, 2
        %v520 = vadd.f32 %v518, %v519
        %v521 = vrot.slane %v520, 1
        %v522 = vadd.f32 %v520, %v521
        %v523 = vmul.f32 %v510, %v272
        %v524 = vmul.f32 %v511, %v273
        %525 = vadd.xlane.f32.xlu0 %v523
        %v526 = vpop.xlane.xlu0 %525
        %527 = vadd.xlane.f32.xlu0 %v524
        %v528 = vpop.xlane.xlu0 %527
        %v529 = vadd.f32 %v526, %v528
        %v530 = vrot.slane %v529, 4
        %v531 = vadd.f32 %v529, %v530
        %v532 = vrot.slane %v531, 2
        %v533 = vadd.f32 %v531, %v532
        %v534 = vrot.slane %v533, 1
        %v535 = vadd.f32 %v533, %v534
        %vm536 = vcmp.eq.s32.totalorder %v275, 7
        %vm537 = vmand %vm289, %vm536
        %v538 = vsel %vm537, %v522, %v505
        %vm539 = vmand %vm293, %vm536
        %v540 = vsel %vm539, %v535, %v538
        %vm541 = vcmp.ge.f32.partialorder %v260, 0.8
        %vm542 = vcmp.ge.f32.partialorder %v261, 0.8
        %v543 = vsel %vm541, 1, 0
        %v544 = vsel %vm542, 1, 0
        %v545 = vcvt.s32.f32 %v543
        %v546 = vcvt.s32.f32 %v544
        %547 = vadd.xlane.f32.xlu0 %v545
        %v548 = vpop.xlane.xlu0 %547
        %549 = vadd.xlane.f32.xlu0 %v546
        %v550 = vpop.xlane.xlu0 %549
        %v551 = vadd.f32 %v548, %v550
        %v552 = vrot.slane %v551, 4
        %v553 = vadd.f32 %v551, %v552
        %v554 = vrot.slane %v553, 2
        %v555 = vadd.f32 %v553, %v554
        %v556 = vrot.slane %v555, 1
        %v557 = vadd.f32 %v555, %v556
        %v558 = vmul.f32 %v545, %v272
        %v559 = vmul.f32 %v546, %v273
        %560 = vadd.xlane.f32.xlu0 %v558
        %v561 = vpop.xlane.xlu0 %560
        %562 = vadd.xlane.f32.xlu0 %v559
        %v563 = vpop.xlane.xlu0 %562
        %v564 = vadd.f32 %v561, %v563
        %v565 = vrot.slane %v564, 4
        %v566 = vadd.f32 %v564, %v565
        %v567 = vrot.slane %v566, 2
        %v568 = vadd.f32 %v566, %v567
        %v569 = vrot.slane %v568, 1
        %v570 = vadd.f32 %v568, %v569
        %vm571 = vcmp.eq.s32.totalorder %v275, 8
        %vm572 = vmand %vm289, %vm571
        %v573 = vsel %vm572, %v557, %v540
        %vm574 = vmand %vm293, %vm571
        %v575 = vsel %vm574, %v570, %v573
        %vm576 = vcmp.ge.f32.partialorder %v260, 0.9
        %vm577 = vcmp.ge.f32.partialorder %v261, 0.9
        %v578 = vsel %vm576, 1, 0
        %v579 = vsel %vm577, 1, 0
        %v580 = vcvt.s32.f32 %v578
        %v581 = vcvt.s32.f32 %v579
        %582 = vadd.xlane.f32.xlu0 %v580
        %v583 = vpop.xlane.xlu0 %582
        %584 = vadd.xlane.f32.xlu0 %v581
        %v585 = vpop.xlane.xlu0 %584
        %v586 = vadd.f32 %v583, %v585
        %v587 = vrot.slane %v586, 4
        %v588 = vadd.f32 %v586, %v587
        %v589 = vrot.slane %v588, 2
        %v590 = vadd.f32 %v588, %v589
        %v591 = vrot.slane %v590, 1
        %v592 = vadd.f32 %v590, %v591
        %v593 = vmul.f32 %v580, %v272
        %v594 = vmul.f32 %v581, %v273
        %595 = vadd.xlane.f32.xlu0 %v593
        %v596 = vpop.xlane.xlu0 %595
        %597 = vadd.xlane.f32.xlu0 %v594
        %v598 = vpop.xlane.xlu0 %597
        %v599 = vadd.f32 %v596, %v598
        %v600 = vrot.slane %v599, 4
        %v601 = vadd.f32 %v599, %v600
        %v602 = vrot.slane %v601, 2
        %v603 = vadd.f32 %v601, %v602
        %v604 = vrot.slane %v603, 1
        %v605 = vadd.f32 %v603, %v604
        %vm606 = vcmp.eq.s32.totalorder %v275, 9
        %vm607 = vmand %vm289, %vm606
        %v608 = vsel %vm607, %v592, %v575
        %vm609 = vmand %vm293, %vm606
        %v610 = vsel %vm609, %v605, %v608
        %vm611 = vcmp.ge.f32.partialorder %v260, 1.000001
        %vm612 = vcmp.ge.f32.partialorder %v261, 1.000001
        %v613 = vsel %vm611, 1, 0
        %v614 = vsel %vm612, 1, 0
        %v615 = vcvt.s32.f32 %v613
        %v616 = vcvt.s32.f32 %v614
        %617 = vadd.xlane.f32.xlu0 %v615
        %v618 = vpop.xlane.xlu0 %617
        %619 = vadd.xlane.f32.xlu0 %v616
        %v620 = vpop.xlane.xlu0 %619
        %v621 = vadd.f32 %v618, %v620
        %v622 = vrot.slane %v621, 4
        %v623 = vadd.f32 %v621, %v622
        %v624 = vrot.slane %v623, 2
        %v625 = vadd.f32 %v623, %v624
        %v626 = vrot.slane %v625, 1
        %v627 = vadd.f32 %v625, %v626
        %v628 = vmul.f32 %v615, %v272
        %v629 = vmul.f32 %v616, %v273
        %630 = vadd.xlane.f32.xlu0 %v628
        %v631 = vpop.xlane.xlu0 %630
        %632 = vadd.xlane.f32.xlu0 %v629
        %v633 = vpop.xlane.xlu0 %632
        %v634 = vadd.f32 %v631, %v633
        %v635 = vrot.slane %v634, 4
        %v636 = vadd.f32 %v634, %v635
        %v637 = vrot.slane %v636, 2
        %v638 = vadd.f32 %v636, %v637
        %v639 = vrot.slane %v638, 1
        %v640 = vadd.f32 %v638, %v639
        %vm641 = vcmp.eq.s32.totalorder %v275, 10
        %vm642 = vmand %vm289, %vm641
        %v643 = vsel %vm642, %v627, %v610
        %vm644 = vmand %vm293, %vm641
        %v645 = vsel %vm644, %v640, %v643
        %646 = vst [vmem:[%s205] sm:$0xff] %v645
        %s647 = sand.u32 %s82, 1
        %s648 = scalar_lea.sflag [#allocation4], %s647
        %s649 = sand.u32 %s82, 1
        %s650 = smul.addr %s649, 8
        %s651 = scalar_lea.vmem [#allocation7], %s650
        // Predicated region
        $region37: #{tpu_custom_call.1} parent=27 // pred_check
          %p652 = pneg %p92
        $region38: #{tpu_custom_call.1} parent=27 // pred_check_branch
          %654 = sbr.rel (%p652) target = $region40
        $region39: #{tpu_custom_call.1} parent=27 // pred_region
          %656 = vsyncadd %s648, 0
          %s657 = smul.addr %s22, 8
          %s658 = scalar_lea.hbm %s2, %s657
          %s660 = sshll.u32 %s651, 4
          %s661 = int_to_ptr.vmem [resolvable:$true] %s660
          %s662 = sshll.u32 %s658, 4
          %s663 = int_to_ptr.hbm [resolvable:$true] %s662
          %665 = dma.vmem_to_hbm [thread:$0]  %s661, 128, %s663, %s648
        $region40: #{tpu_custom_call.1} parent=27 // pred_fallthru
          _
      $region28: #{tpu_custom_call.1} parent=5 // pred_fallthru
        _
      %p666 = scmp.le.s32.totalorder 2, %s17
      // Predicated region
      $region41: #{tpu_custom_call.1} parent=5 // pred_check
        %p667 = pneg %p666
      $region42: #{tpu_custom_call.1} parent=5 // pred_check_branch
        %669 = sbr.rel (%p667) target = $region44
      $region43: #{tpu_custom_call.1} parent=5 // pred_region
        %s670 = ssub.s32 %s17, 2
        // Predicated region
        $region45: #{tpu_custom_call.1} parent=43 // pred_check
          %p671 = pneg %p98
        $region46: #{tpu_custom_call.1} parent=43 // pred_check_branch
          %673 = sbr.rel (%p671) target = $region48
        $region47: #{tpu_custom_call.1} parent=43 // pred_region
          %s674 = sand.u32 %s83, 1
          %s675 = scalar_lea.sflag [#allocation4], %s674
          %s676 = sand.u32 %s83, 1
          %s677 = smul.addr %s676, 8
          %s678 = scalar_lea.vmem [#allocation7], %s677
          %680 = dma.done %s675, 128
        $region48: #{tpu_custom_call.1} parent=43 // pred_fallthru
          _
      $region44: #{tpu_custom_call.1} parent=5 // pred_fallthru
        _
    $region6: #{tpu_custom_call.1} parent=1 // loop_footer
      %s21 = sadd.s32 1, %s17
    $region7: #{tpu_custom_call.1} parent=1 // loop_footer_branch
      %16 = sbr.rel target = $region3
    $region8: #{tpu_custom_call.1} parent=1 // loop_exit
      _
    %681 = vsyncpa [#allocation3], 1
    %s682 = scalar_lea.sflag [#allocation3], 1
    %683 = vsyncpa %s682, 1
    %684 = vsyncpa [#allocation6], 1
    %s685 = scalar_lea.sflag [#allocation6], 1
    %686 = vsyncpa %s685, 1
    %687 = vsyncpa [#allocation4], 1
    %s688 = scalar_lea.sflag [#allocation4], 1
    %689 = vsyncpa %s688, 1

</llo_original>
